<compile_context>
chip_gen: v6e
topology: v6e:2x2x1
jax: 0.10.0
libtpu: 0.0.40
codegen_flags: <defaults>
</compile_context>

<pallas_src>
import functools

import jax
import jax.numpy as jnp
from jax import lax
from jax.experimental import pallas as pl
from jax.experimental.pallas import tpu as pltpu


# ---------------- Fused Pallas kernel ----------------

def _fused_conv_bn_lrelu_kernel(p_ref, w_ref, g_ref, b_ref, o_ref,
                                sum_sc, sq_sc, *, inv_count, eps, neg_slope):
    n = pl.program_id(0)

    @pl.when(n == 0)
    def _init():
        sum_sc[...] = jnp.zeros_like(sum_sc)
        sq_sc[...] = jnp.zeros_like(sq_sc)

    # conv as matmul on the MXU: (Cout, K) @ (K, OH*OW) -> (Cout, OH*OW), f32 accum.
    y = jnp.dot(w_ref[...], p_ref[...], preferred_element_type=jnp.float32)

    # Stash this batch's conv output into the VMEM-resident output block
    # (single HBM writeback happens only when the grid finishes).
    o_ref[n] = y

    # Per-channel partial sums (cross-lane reduce -> XLU slot), kept in VMEM scratch.
    sum_sc[...] += jnp.sum(y, axis=1, keepdims=True)
    sq_sc[...] += jnp.sum(y * y, axis=1, keepdims=True)

    @pl.when(n == pl.num_programs(0) - 1)
    def _finalize():
        # Training-mode BatchNorm: biased variance over (N, OH, OW).
        mean = sum_sc[...] * inv_count                                   # (Cout, 1)
        var = jnp.maximum(sq_sc[...] * inv_count - mean * mean, 0.0)     # clamp >= 0
        scale = g_ref[...] * lax.rsqrt(var + eps)                        # EUP rsqrt
        shift = b_ref[...] - mean * scale
        z = o_ref[...] * scale[None] + shift[None]                       # (N, Cout, S)
        o_ref[...] = jnp.where(z >= 0.0, z, neg_slope * z)               # LeakyReLU(0.2)


# ---------------- Wrapper ----------------

def noise_encoder_forward(x, conv_w, gamma, beta, *, stride, padding,
                          eps=1e-5, mxu_dtype=jnp.bfloat16):
    """x: (N, C_in, H, W) float32, conv_w: (C_out, C_in, KH, KW)."""
    N, Cin, H, W = x.shape
    Cout, _, KH, KW = conv_w.shape
    OH = (H + 2 * padding - KH) // stride + 1
    OW = (W + 2 * padding - KW) // stride + 1
    K = Cin * KH * KW
    S = OH * OW

    # --- im2col glue (plain JAX), channels-on-sublanes / spatial-on-lanes layout ---
    # TODO(synk): for realistic H, W build the patches inside the kernel (BlockSpec
    # over kh/kw or manual DMA) instead of writing the KH*KW-inflated copy to HBM.
    xp = jnp.pad(x, ((0, 0), (0, 0), (padding, padding), (padding, padding)))
    cols = []
    for kh in range(KH):
        for kw in range(KW):
            cols.append(
                lax.slice(
                    xp,
                    (0, 0, kh, kw),
                    (N, Cin, kh + stride * (OH - 1) + 1, kw + stride * (OW - 1) + 1),
                    (1, 1, stride, stride),
                )
            )  # (N, Cin, OH, OW)
    # (N, Cin, KH*KW, OH, OW) -> (N, K, S); flattening order matches conv_w.reshape(Cout, K)
    patches = jnp.stack(cols, axis=2).reshape(N, K, S).astype(mxu_dtype)
    w_mat = conv_w.reshape(Cout, K).astype(mxu_dtype)
    g2 = gamma.reshape(Cout, 1).astype(jnp.float32)
    b2 = beta.reshape(Cout, 1).astype(jnp.float32)

    kernel = functools.partial(
        _fused_conv_bn_lrelu_kernel,
        inv_count=1.0 / float(N * S), eps=float(eps), neg_slope=0.2)

    out = pl.pallas_call(
        kernel,
        out_shape=jax.ShapeDtypeStruct((N, Cout, S), jnp.float32),
        grid=(N,),
        in_specs=[
            # one batch's patches per grid step (leading batch dim squeezed)
            pl.BlockSpec((None, K, S), lambda n: (n, 0, 0)),
            # weights / BN params stay resident (same block every step)
            pl.BlockSpec((Cout, K), lambda n: (0, 0)),
            pl.BlockSpec((Cout, 1), lambda n: (0, 0)),
            pl.BlockSpec((Cout, 1), lambda n: (0, 0)),
        ],
        # whole output resident in VMEM across the grid -> single writeback at the end
        out_specs=pl.BlockSpec((N, Cout, S), lambda n: (0, 0, 0)),
        scratch_shapes=[pltpu.VMEM((Cout, 1), jnp.float32),   # per-channel sum
                        pltpu.VMEM((Cout, 1), jnp.float32)],  # per-channel sum of squares
        compiler_params=pltpu.CompilerParams(
            # grid axis carries the stats reduction + resident output -> must be arbitrary
            dimension_semantics=("arbitrary",)),
    )(patches, w_mat, g2, b2)

    # already channel-major: plain reshape, no transpose
    return out.reshape(N, Cout, OH, OW)


# ---------------- Pure-JAX reference for verification ----------------

def _reference(x, conv_w, gamma, beta, *, stride, padding, eps=1e-5):
    y = lax.conv_general_dilated(
        x, conv_w, window_strides=(stride, stride),
        padding=[(padding, padding), (padding, padding)],
        dimension_numbers=("NCHW", "OIHW", "NCHW"),
    )
    mean = jnp.mean(y, axis=(0, 2, 3), keepdims=True)
    var = jnp.mean((y - mean) ** 2, axis=(0, 2, 3), keepdims=True)
    yn = (y - mean) / jnp.sqrt(var + eps)
    yn = yn * gamma.reshape(1, -1, 1, 1) + beta.reshape(1, -1, 1, 1)
    return jnp.where(yn >= 0.0, yn, 0.2 * yn)


if __name__ == "__main__":
    # Module config: NoiseEncoder(channel_in=4, channel_out=8, kernel_size=3, stride=1, padding=1)
    N, Cin, H, W = 2, 4, 16, 16
    Cout, KH, KW = 8, 3, 3
    stride, padding = 1, 1

    key = jax.random.PRNGKey(0)
    kx, kw, kg, kb = jax.random.split(key, 4)
    x = jax.random.normal(kx, (N, Cin, H, W), dtype=jnp.float32)
    conv_w = 0.1 * jax.random.normal(kw, (Cout, Cin, KH, KW), dtype=jnp.float32)
    gamma = 1.0 + 0.05 * jax.random.normal(kg, (Cout,), dtype=jnp.float32)
    beta = 0.05 * jax.random.normal(kb, (Cout,), dtype=jnp.float32)

    out = noise_encoder_forward(x, conv_w, gamma, beta, stride=stride, padding=padding)
    out = jax.block_until_ready(out)
    assert out.shape == (N, Cout, H, W)

    # Tight check: reference run on the same bf16-rounded conv operands (same algorithm).
    xq = x.astype(jnp.bfloat16).astype(jnp.float32)
    wq = conv_w.astype(jnp.bfloat16).astype(jnp.float32)
    ref_q = _reference(xq, wq, gamma, beta, stride=stride, padding=padding)
    err_q = float(jnp.max(jnp.abs(out - ref_q)))
    assert jnp.allclose(out, ref_q, atol=2e-3, rtol=2e-3), err_q

    # Loose sanity check against pure-f32 module semantics (bf16 MXU inputs, f32 accumulation).
    ref = _reference(x, conv_w, gamma, beta, stride=stride, padding=padding)
    err = float(jnp.max(jnp.abs(out - ref)))
    assert jnp.allclose(out, ref, atol=5e-2, rtol=5e-2), err

    # TODO(synk): forward_clean / forward_noise (random label permutation, per-class std
    # buffer, gaussian noise injection, bn_noise) are training-time stochastic paths and
    # are not part of forward().
    print("KERNEL_OK")
</pallas_src>

<mosaic_0001>
module attributes {stable_mosaic.version = 11 : i64} {
  func.func @_fused_conv_bn_lrelu_kernel(%arg0: i32, %arg1: memref<1x36x256xbf16, #tpu.memory_space<vmem>>, %arg2: memref<8x36xbf16, #tpu.memory_space<vmem>>, %arg3: memref<8x1xf32, #tpu.memory_space<vmem>>, %arg4: memref<8x1xf32, #tpu.memory_space<vmem>>, %arg5: memref<2x8x256xf32, #tpu.memory_space<vmem>>, %arg6: memref<8x1xf32, #tpu.memory_space<vmem>>, %arg7: memref<8x1xf32, #tpu.memory_space<vmem>>) attributes {dimension_semantics = [#tpu.dimension_semantics<arbitrary>], iteration_bounds = array<i64: 2>, scalar_prefetch = 0 : i64, scratch_operands = 2 : i64, tpu.core_type = #tpu.core_type<tc>, window_params = [{transform_indices = @transform_0, window_bounds = array<i64: 1, 36, 256>}, {pipeline_mode = #tpu.pipeline_mode<synchronous>, transform_indices = @transform_1, window_bounds = array<i64: 8, 36>}, {pipeline_mode = #tpu.pipeline_mode<synchronous>, transform_indices = @transform_2, window_bounds = array<i64: 8, 1>}, {pipeline_mode = #tpu.pipeline_mode<synchronous>, transform_indices = @transform_3, window_bounds = array<i64: 8, 1>}, {pipeline_mode = #tpu.pipeline_mode<synchronous>, transform_indices = @transform_4, window_bounds = array<i64: 2, 8, 256>}]} {
    %c0_i32 = arith.constant 0 : i32
    %0 = arith.cmpi eq, %arg0, %c0_i32 : i32
    %1 = arith.extui %0 : i1 to i32
    %c0_i32_0 = arith.constant 0 : i32
    %2 = arith.cmpi ne, %1, %c0_i32_0 : i32
    scf.if %2 {
      %cst_18 = arith.constant 0.000000e+00 : f32
      %25 = vector.broadcast %cst_18 : f32 to vector<8x1xf32>
      %c0_19 = arith.constant 0 : index
      %c0_20 = arith.constant 0 : index
      %26 = vector.load %arg6[%c0_19, %c0_20] : memref<8x1xf32, #tpu.memory_space<vmem>>, vector<8x1xf32>
      tpu.vector_store %arg6[%c0_19, %c0_20], %25 {strides = array<i32>} : memref<8x1xf32, #tpu.memory_space<vmem>>, vector<8x1xf32>,
      %cst_21 = arith.constant 0.000000e+00 : f32
      %27 = vector.broadcast %cst_21 : f32 to vector<8x1xf32>
      %c0_22 = arith.constant 0 : index
      %c0_23 = arith.constant 0 : index
      %28 = vector.load %arg7[%c0_22, %c0_23] : memref<8x1xf32, #tpu.memory_space<vmem>>, vector<8x1xf32>
      tpu.vector_store %arg7[%c0_22, %c0_23], %27 {strides = array<i32>} : memref<8x1xf32, #tpu.memory_space<vmem>>, vector<8x1xf32>,
    } else {
    }
    %c0 = arith.constant 0 : index
    %c0_1 = arith.constant 0 : index
    %3 = vector.load %arg2[%c0, %c0_1] : memref<8x36xbf16, #tpu.memory_space<vmem>>, vector<8x36xbf16>
    %c0_2 = arith.constant 0 : index
    %c0_3 = arith.constant 0 : index
    %c0_4 = arith.constant 0 : index
    %4 = vector.load %arg1[%c0_2, %c0_3, %c0_4] : memref<1x36x256xbf16, #tpu.memory_space<vmem>>, vector<1x36x256xbf16>
    %5 = vector.shape_cast %4 : vector<1x36x256xbf16> to vector<36x256xbf16>
    %cst = arith.constant dense<0.000000e+00> : vector<8x256xf32>
    %6 = tpu.matmul %3, %5, %cst {dimension_numbers = #tpu.dot_dimension_numbers<[1], [0], [0], [1], [0, 0, 1, 1], [], []>} : vector<8x36xbf16>, vector<36x256xbf16>, vector<8x256xf32> -> vector<8x256xf32>
    %7 = arith.index_cast %arg0 : i32 to index
    %c0_5 = arith.constant 0 : index
    %c0_6 = arith.constant 0 : index
    %8 = vector.load %arg5[%7, %c0_5, %c0_6] : memref<2x8x256xf32, #tpu.memory_space<vmem>>, vector<1x8x256xf32>
    %9 = vector.shape_cast %8 : vector<1x8x256xf32> to vector<8x256xf32>
    %10 = vector.shape_cast %6 : vector<8x256xf32> to vector<1x8x256xf32>
    tpu.vector_store %arg5[%7, %c0_5, %c0_6], %10 {strides = array<i32>} : memref<2x8x256xf32, #tpu.memory_space<vmem>>, vector<1x8x256xf32>,
    %c0_7 = arith.constant 0 : index
    %c0_8 = arith.constant 0 : index
    %11 = vector.load %arg6[%c0_7, %c0_8] : memref<8x1xf32, #tpu.memory_space<vmem>>, vector<8x1xf32>
    %cst_9 = arith.constant dense<0.000000e+00> : vector<8xf32>
    %12 = vector.multi_reduction <add>, %6, %cst_9 [1] : vector<8x256xf32> to vector<8xf32>
    %13 = vector.shape_cast %12 : vector<8xf32> to vector<8x1xf32>
    %14 = arith.addf %11, %13 : vector<8x1xf32>
    %c0_10 = arith.constant 0 : index
    %c0_11 = arith.constant 0 : index
    %15 = vector.load %arg6[%c0_10, %c0_11] : memref<8x1xf32, #tpu.memory_space<vmem>>, vector<8x1xf32>
    tpu.vector_store %arg6[%c0_10, %c0_11], %14 {strides = array<i32>} : memref<8x1xf32, #tpu.memory_space<vmem>>, vector<8x1xf32>,
    %c0_12 = arith.constant 0 : index
    %c0_13 = arith.constant 0 : index
    %16 = vector.load %arg7[%c0_12, %c0_13] : memref<8x1xf32, #tpu.memory_space<vmem>>, vector<8x1xf32>
    %17 = arith.mulf %6, %6 : vector<8x256xf32>
    %cst_14 = arith.constant dense<0.000000e+00> : vector<8xf32>
    %18 = vector.multi_reduction <add>, %17, %cst_14 [1] : vector<8x256xf32> to vector<8xf32>
    %19 = vector.shape_cast %18 : vector<8xf32> to vector<8x1xf32>
    %20 = arith.addf %16, %19 : vector<8x1xf32>
    %c0_15 = arith.constant 0 : index
    %c0_16 = arith.constant 0 : index
    %21 = vector.load %arg7[%c0_15, %c0_16] : memref<8x1xf32, #tpu.memory_space<vmem>>, vector<8x1xf32>
    tpu.vector_store %arg7[%c0_15, %c0_16], %20 {strides = array<i32>} : memref<8x1xf32, #tpu.memory_space<vmem>>, vector<8x1xf32>,
    %c1_i32 = arith.constant 1 : i32
    %22 = arith.cmpi eq, %arg0, %c1_i32 : i32
    %23 = arith.extui %22 : i1 to i32
    %c0_i32_17 = arith.constant 0 : i32
    %24 = arith.cmpi ne, %23, %c0_i32_17 : i32
    scf.if %24 {
      %c0_18 = arith.constant 0 : index
      %c0_19 = arith.constant 0 : index
      %25 = vector.load %arg6[%c0_18, %c0_19] : memref<8x1xf32, #tpu.memory_space<vmem>>, vector<8x1xf32>
      %cst_20 = arith.constant 0.001953125 : f32
      %26 = vector.broadcast %cst_20 : f32 to vector<8x1xf32>
      %27 = arith.mulf %25, %26 : vector<8x1xf32>
      %c0_21 = arith.constant 0 : index
      %c0_22 = arith.constant 0 : index
      %28 = vector.load %arg7[%c0_21, %c0_22] : memref<8x1xf32, #tpu.memory_space<vmem>>, vector<8x1xf32>
      %cst_23 = arith.constant 0.001953125 : f32
      %29 = vector.broadcast %cst_23 : f32 to vector<8x1xf32>
      %30 = arith.mulf %28, %29 : vector<8x1xf32>
      %31 = arith.mulf %27, %27 : vector<8x1xf32>
      %32 = arith.subf %30, %31 : vector<8x1xf32>
      %cst_24 = arith.constant 0.000000e+00 : f32
      %33 = vector.broadcast %cst_24 : f32 to vector<8x1xf32>
      %34 = arith.maximumf %32, %33 : vector<8x1xf32>
      %c0_25 = arith.constant 0 : index
      %c0_26 = arith.constant 0 : index
      %35 = vector.load %arg3[%c0_25, %c0_26] : memref<8x1xf32, #tpu.memory_space<vmem>>, vector<8x1xf32>
      %cst_27 = arith.constant 9.99999974E-6 : f32
      %36 = vector.broadcast %cst_27 : f32 to vector<8x1xf32>
      %37 = arith.addf %34, %36 : vector<8x1xf32>
      %38 = math.rsqrt %37 : vector<8x1xf32>
      %39 = arith.mulf %35, %38 : vector<8x1xf32>
      %c0_28 = arith.constant 0 : index
      %c0_29 = arith.constant 0 : index
      %40 = vector.load %arg4[%c0_28, %c0_29] : memref<8x1xf32, #tpu.memory_space<vmem>>, vector<8x1xf32>
      %41 = arith.mulf %27, %39 : vector<8x1xf32>
      %42 = arith.subf %40, %41 : vector<8x1xf32>
      %c0_30 = arith.constant 0 : index
      %c0_31 = arith.constant 0 : index
      %c0_32 = arith.constant 0 : index
      %43 = vector.load %arg5[%c0_30, %c0_31, %c0_32] : memref<2x8x256xf32, #tpu.memory_space<vmem>>, vector<2x8x256xf32>
      %44 = vector.shape_cast %39 : vector<8x1xf32> to vector<1x8x1xf32>
      %45 = vector.broadcast %44 : vector<1x8x1xf32> to vector<2x8x256xf32>
      %46 = arith.mulf %43, %45 : vector<2x8x256xf32>
      %47 = vector.shape_cast %42 : vector<8x1xf32> to vector<1x8x1xf32>
      %48 = vector.broadcast %47 : vector<1x8x1xf32> to vector<2x8x256xf32>
      %49 = arith.addf %46, %48 : vector<2x8x256xf32>
      %cst_33 = arith.constant 0.000000e+00 : f32
      %50 = vector.broadcast %cst_33 : f32 to vector<2x8x256xf32>
      %51 = arith.cmpf oge, %49, %50 : vector<2x8x256xf32>
      %cst_34 = arith.constant 2.000000e-01 : f32
      %52 = vector.broadcast %cst_34 : f32 to vector<2x8x256xf32>
      %53 = arith.mulf %52, %49 : vector<2x8x256xf32>
      %54 = arith.select %51, %49, %53 : vector<2x8x256xi1>, vector<2x8x256xf32>
      %c0_35 = arith.constant 0 : index
      %c0_36 = arith.constant 0 : index
      %c0_37 = arith.constant 0 : index
      %55 = vector.load %arg5[%c0_35, %c0_36, %c0_37] : memref<2x8x256xf32, #tpu.memory_space<vmem>>, vector<2x8x256xf32>
      tpu.vector_store %arg5[%c0_35, %c0_36, %c0_37], %54 {strides = array<i32>} : memref<2x8x256xf32, #tpu.memory_space<vmem>>, vector<2x8x256xf32>,
    } else {
    }
    return
  }
  func.func @transform_0(%arg0: i32) -> (i32, i32, i32) {
    %c0_i32 = arith.constant 0 : i32
    %c0_i32_0 = arith.constant 0 : i32
    %c0_i32_1 = arith.constant 0 : i32
    return %arg0, %c0_i32, %c0_i32_0 : i32, i32, i32
  }
  func.func @transform_1(%arg0: i32) -> (i32, i32) {
    %c0_i32 = arith.constant 0 : i32
    %c0_i32_0 = arith.constant 0 : i32
    %c0_i32_1 = arith.constant 0 : i32
    return %c0_i32, %c0_i32_0 : i32, i32
  }
  func.func @transform_2(%arg0: i32) -> (i32, i32) {
    %c0_i32 = arith.constant 0 : i32
    %c0_i32_0 = arith.constant 0 : i32
    %c0_i32_1 = arith.constant 0 : i32
    return %c0_i32, %c0_i32_0 : i32, i32
  }
  func.func @transform_3(%arg0: i32) -> (i32, i32) {
    %c0_i32 = arith.constant 0 : i32
    %c0_i32_0 = arith.constant 0 : i32
    %c0_i32_1 = arith.constant 0 : i32
    return %c0_i32, %c0_i32_0 : i32, i32
  }
  func.func @transform_4(%arg0: i32) -> (i32, i32, i32) {
    %c0_i32 = arith.constant 0 : i32
    %c0_i32_0 = arith.constant 0 : i32
    %c0_i32_1 = arith.constant 0 : i32
    %c0_i32_2 = arith.constant 0 : i32
    return %c0_i32, %c0_i32_0, %c0_i32_1 : i32, i32, i32
  }
}

</mosaic_0001>

<llo_original>
// kernel: tpu_custom_call.1
$region0: #{tpu_custom_call.1}
  #allocation0 [shape = 'u32[]', space=smem, size = 0x4, offset = 0x4, fixed_abs, tag = 'smem constant byte address 0x4 - core index']
  #allocation1 [shape = 'u32[144,128]{1,0:T(1,128)}', space=vmem, size = 0x12000, scoped, tag = 'internal scratch']
  #allocation2 [shape = 'f32[8,1]{1,0:T(8,128)}', space=vmem, size = 0x1000, scoped, tag = 'scratch operand']
  #allocation3 [shape = 'f32[8,1]{1,0:T(8,128)}', space=vmem, size = 0x1000, scoped, tag = 'scratch operand']
  %s0 = inlined_call_operand.vmem [shape: bf16[2,36,256], index: 0, kind: input, shape index: {}]
  %s1 = inlined_call_operand.vmem [shape: bf16[8,36], index: 1, kind: input, shape index: {}]
  %s2 = inlined_call_operand.vmem [shape: f32[8,1], index: 2, kind: input, shape index: {}]
  %s3 = inlined_call_operand.vmem [shape: f32[8,1], index: 3, kind: input, shape index: {}]
  %s4 = inlined_call_operand.hbm [shape: f32[2,8,256], index: 4, kind: output, shape index: {}]
  %s5 = sld [smem:[#allocation0]]
  $region57: #{tpu_custom_call.1} parent=0
    _
  %s7 = ssub.s32 1, %s5
  %s8 = scalar_select 0, %s7, %s5
  $region1: #{tpu_custom_call.1} parent=0
    #allocation4 [shape = 'u8[16384]{0}', space=vmem, size = 0x4000, scoped, tag = 'output window, operand 0, single buffered']
    #allocation5 [shape = 's32[2]{0}', space=sflag, size = 0x8, scoped, tag = 'scoped memory for tpu_custom_call.1']
    %9 = vsyncpa [#allocation5], 0
    loop: start=0, step=1, limit=4
    $region2: #{tpu_custom_call.1} parent=1 // loop_pre_header
      _
    $region3: #{tpu_custom_call.1} parent=1 // loop_header
      %s11 = sphi 0, %s15
      %p12 = scmp.ge.s32.totalorder %s11, 4
      %s21 = sphi 0, %s23
      %s24 = sphi 0, %s21
      %s25 = sphi 0, %s24
      %s41 = sphi 0, %s25
      %s45 = sphi 0, %s45
      %s47 = sphi 0, %s45
      %s48 = sphi 0, %s47
      %s62 = sphi 0, %s48
      %s66 = sphi 0, %s66
      %s68 = sphi 0, %s66
      %s69 = sphi 0, %s68
      %s83 = sphi 0, %s69
      %s87 = sphi 0, %s87
      %s89 = sphi 0, %s87
      %s90 = sphi 0, %s89
      %s104 = sphi 0, %s90
      %s108 = sphi 0, %s108
      %s110 = sphi 0, %s108
      %s111 = sphi 0, %s110
      %s125 = sphi 0, %s111
    $region4: #{tpu_custom_call.1} parent=1 // loop_header_branch
      %14 = sbr.rel (%p12) target = $region8
    $region5: #{tpu_custom_call.1} parent=1 // loop_body
      %s16 = ssub.s32 %s11, 1
      %s17 = ssub.s32 %s11, 2
      %s18 = sadd.s32 %s11, 1
      %s19 = ssub.s32 %s11, %s18
      %p20 = scmp.eq.s32.totalorder %s19, 0
      %s22 = sadd.s32 %s21, 1
      %s23 = scalar_select %p20, %s21, %s22
      %p26 = pneg %p20
      %p27 = scmp.eq.s32.totalorder %s11, 1
      %p28 = por %p26, %p27
      %p29 = scmp.ne.s32.totalorder %s21, %s24
      %p30 = scmp.eq.s32.totalorder %s11, 0
      %p31 = por %p29, %p30
      %p32 = scmp.ne.s32.totalorder %s21, %s24
      %p33 = scmp.eq.s32.totalorder %s16, 1
      %p34 = por %p32, %p33
      %p35 = scmp.ne.s32.totalorder %s24, %s25
      %p36 = scmp.eq.s32.totalorder %s16, 0
      %p37 = por %p35, %p36
      %p38 = scmp.ne.s32.totalorder %s24, %s25
      %p39 = scmp.eq.s32.totalorder %s17, 1
      %p40 = por %p38, %p39
      %p42 = scmp.ne.s32.totalorder %s25, %s41
      %p43 = scmp.eq.s32.totalorder %s17, 0
      %p44 = por %p42, %p43
      %s46 = sadd.s32 %s45, 1
      %p49 = scmp.eq.s32.totalorder %s11, 1
      %p50 = scmp.ne.s32.totalorder %s45, %s47
      %p51 = scmp.eq.s32.totalorder %s11, 0
      %p52 = por %p50, %p51
      %p53 = scmp.ne.s32.totalorder %s45, %s47
      %p54 = scmp.eq.s32.totalorder %s16, 1
      %p55 = por %p53, %p54
      %p56 = scmp.ne.s32.totalorder %s47, %s48
      %p57 = scmp.eq.s32.totalorder %s16, 0
      %p58 = por %p56, %p57
      %p59 = scmp.ne.s32.totalorder %s47, %s48
      %p60 = scmp.eq.s32.totalorder %s17, 1
      %p61 = por %p59, %p60
      %p63 = scmp.ne.s32.totalorder %s48, %s62
      %p64 = scmp.eq.s32.totalorder %s17, 0
      %p65 = por %p63, %p64
      %s67 = sadd.s32 %s66, 1
      %p70 = scmp.eq.s32.totalorder %s11, 1
      %p71 = scmp.ne.s32.totalorder %s66, %s68
      %p72 = scmp.eq.s32.totalorder %s11, 0
      %p73 = por %p71, %p72
      %p74 = scmp.ne.s32.totalorder %s66, %s68
      %p75 = scmp.eq.s32.totalorder %s16, 1
      %p76 = por %p74, %p75
      %p77 = scmp.ne.s32.totalorder %s68, %s69
      %p78 = scmp.eq.s32.totalorder %s16, 0
      %p79 = por %p77, %p78
      %p80 = scmp.ne.s32.totalorder %s68, %s69
      %p81 = scmp.eq.s32.totalorder %s17, 1
      %p82 = por %p80, %p81
      %p84 = scmp.ne.s32.totalorder %s69, %s83
      %p85 = scmp.eq.s32.totalorder %s17, 0
      %p86 = por %p84, %p85
      %s88 = sadd.s32 %s87, 1
      %p91 = scmp.eq.s32.totalorder %s11, 1
      %p92 = scmp.ne.s32.totalorder %s87, %s89
      %p93 = scmp.eq.s32.totalorder %s11, 0
      %p94 = por %p92, %p93
      %p95 = scmp.ne.s32.totalorder %s87, %s89
      %p96 = scmp.eq.s32.totalorder %s16, 1
      %p97 = por %p95, %p96
      %p98 = scmp.ne.s32.totalorder %s89, %s90
      %p99 = scmp.eq.s32.totalorder %s16, 0
      %p100 = por %p98, %p99
      %p101 = scmp.ne.s32.totalorder %s89, %s90
      %p102 = scmp.eq.s32.totalorder %s17, 1
      %p103 = por %p101, %p102
      %p105 = scmp.ne.s32.totalorder %s90, %s104
      %p106 = scmp.eq.s32.totalorder %s17, 0
      %p107 = por %p105, %p106
      %s109 = sadd.s32 %s108, 1
      %p112 = scmp.eq.s32.totalorder %s11, 1
      %p113 = scmp.ne.s32.totalorder %s108, %s110
      %p114 = scmp.eq.s32.totalorder %s11, 0
      %p115 = por %p113, %p114
      %p116 = scmp.ne.s32.totalorder %s108, %s110
      %p117 = scmp.eq.s32.totalorder %s16, 1
      %p118 = por %p116, %p117
      %p119 = scmp.ne.s32.totalorder %s110, %s111
      %p120 = scmp.eq.s32.totalorder %s16, 0
      %p121 = por %p119, %p120
      %p122 = scmp.ne.s32.totalorder %s110, %s111
      %p123 = scmp.eq.s32.totalorder %s17, 1
      %p124 = por %p122, %p123
      %p126 = scmp.ne.s32.totalorder %s111, %s125
      %p127 = scmp.eq.s32.totalorder %s17, 0
      %p128 = por %p126, %p127
      %p129 = scmp.le.s32.totalorder 1, %s11
      %p130 = scmp.lt.s32.totalorder %s11, 3
      %p131 = pnand %p129, %p130
      %p132 = pneg %p131
      // Predicated region
      $region9: #{tpu_custom_call.1} parent=5 // pred_check
        _
      $region10: #{tpu_custom_call.1} parent=5 // pred_check_branch
        %134 = sbr.rel (%p131) target = $region12
      $region11: #{tpu_custom_call.1} parent=5 // pred_region
        %s135 = ssub.s32 %s11, 1
        // Predicated region
        $region13: #{tpu_custom_call.1} parent=11 // pred_check
          %p136 = pneg %p58
        $region14: #{tpu_custom_call.1} parent=11 // pred_check_branch
          %138 = sbr.rel (%p136) target = $region16
        $region15: #{tpu_custom_call.1} parent=11 // pred_region
          _
        $region16: #{tpu_custom_call.1} parent=11 // pred_fallthru
          _
        // Predicated region
        $region17: #{tpu_custom_call.1} parent=11 // pred_check
          %p139 = pneg %p79
        $region18: #{tpu_custom_call.1} parent=11 // pred_check_branch
          %141 = sbr.rel (%p139) target = $region20
        $region19: #{tpu_custom_call.1} parent=11 // pred_region
          _
        $region20: #{tpu_custom_call.1} parent=11 // pred_fallthru
          _
        // Predicated region
        $region21: #{tpu_custom_call.1} parent=11 // pred_check
          %p142 = pneg %p100
        $region22: #{tpu_custom_call.1} parent=11 // pred_check_branch
          %144 = sbr.rel (%p142) target = $region24
        $region23: #{tpu_custom_call.1} parent=11 // pred_region
          _
        $region24: #{tpu_custom_call.1} parent=11 // pred_fallthru
          _
      $region12: #{tpu_custom_call.1} parent=5 // pred_fallthru
        _
      %p145 = scmp.lt.s32.totalorder %s11, 2
      // Predicated region
      $region25: #{tpu_custom_call.1} parent=5 // pred_check
        %p146 = pneg %p145
      $region26: #{tpu_custom_call.1} parent=5 // pred_check_branch
        %148 = sbr.rel (%p146) target = $region28
      $region27: #{tpu_custom_call.1} parent=5 // pred_region
        // Predicated region
        $region29: #{tpu_custom_call.1} parent=27 // pred_check
          %p149 = pneg %p31
        $region30: #{tpu_custom_call.1} parent=27 // pred_check_branch
          %151 = sbr.rel (%p149) target = $region32
        $region31: #{tpu_custom_call.1} parent=27 // pred_region
          %p152 = scmp.lt.s32.totalorder %s11, 1
          %s153 = scalar_select %p152, %s11, 1
          %s154 = smul.addr %s153, 10
          %s155 = smul.addr %s154, 4
          %s156 = scalar_lea.vmem %s0, %s155
        $region32: #{tpu_custom_call.1} parent=27 // pred_fallthru
          _
      $region28: #{tpu_custom_call.1} parent=5 // pred_fallthru
        _
      %p157 = scmp.le.s32.totalorder 1, %s11
      %p158 = scmp.lt.s32.totalorder %s11, 3
      %p159 = pnand %p157, %p158
      %p160 = pneg %p159
      // Predicated region
      $region33: #{tpu_custom_call.1} parent=5 // pred_check
        _
      $region34: #{tpu_custom_call.1} parent=5 // pred_check_branch
        %162 = sbr.rel (%p159) target = $region36
      $region35: #{tpu_custom_call.1} parent=5 // pred_region
        %s163 = ssub.s32 %s11, 1
        %p164 = scmp.lt.s32.totalorder %s16, 1
        %s165 = scalar_select %p164, %s16, 1
        %s166 = smul.addr %s165, 10
        %s167 = smul.addr %s166, 4
        %s168 = scalar_lea.vmem %s0, %s167
        %p169 = pneg %p37
        %p170 = pneg %p34
        %p171 = pneg %p58
        %p172 = pneg %p55
        %p173 = pneg %p79
        %p174 = pneg %p76
        %p175 = pneg %p100
        %p176 = pneg %p97
        %p177 = pneg %p121
        %p178 = pneg %p118
        %p179 = scmp.lt.s32.totalorder %s16, 1
        %s180 = scalar_select %p179, %s16, 1
        %s181 = smul.addr %s180, 10
        %s182 = smul.addr %s181, 4
        %s183 = scalar_lea.vmem %s0, %s182
        %p185 = scmp.eq.s32.totalorder %s16, 0
        // Predicated region
        $region37: #{tpu_custom_call.1} parent=35 // pred_check
          %p186 = pneg %p185
        $region38: #{tpu_custom_call.1} parent=35 // pred_check_branch
          %188 = sbr.rel (%p186) target = $region40
        $region39: #{tpu_custom_call.1} parent=35 // pred_region
          %vm189 = vcmask 7168
          %190 = vst.msk [vmem:[#allocation2] sm:$0xff] %vm189, 0.0
          %191 = vst.msk [vmem:[#allocation3] sm:$0xff] %vm189, 0.0
        $region40: #{tpu_custom_call.1} parent=35 // pred_fallthru
          _
        %v192 = vld [vmem:[%s1] sm:$0xf]
        %v193 = vld [vmem:[%s183] sm:$0xff]
        %v194 = vld [vmem:[%s183 + $0x8] sm:$0xff]
        %v195 = vld [vmem:[%s183 + $0x10] sm:$0xff]
        %v196 = vld [vmem:[%s183 + $0x18] sm:$0xff]
        %v197 = vld [vmem:[%s183 + $0x20] sm:$0x33]
        %v203 = vunpack.c.l.b16 %v193
        %v204 = vunpack.c.h.b16 %v193
        %v205 = vunpack.c.l.b16 %v194
        %v206 = vunpack.c.h.b16 %v194
        %v207 = vunpack.c.l.b16 %v195
        %v208 = vunpack.c.h.b16 %v195
        %v209 = vunpack.c.l.b16 %v196
        %v210 = vunpack.c.h.b16 %v196
        %v211 = vunpack.c.l.b16 %v197
        %v212 = vunpack.c.h.b16 %v197
        %v213 = vpack.c.b16 %v205, %v203
        %v214 = vpack.c.b16 %v206, %v204
        %v215 = vpack.c.b16 %v209, %v207
        %v216 = vpack.c.b16 %v210, %v208
        %v217 = vpack.c.b16 %v211, %v211
        %v218 = vpack.c.b16 %v212, %v212
        %vm223 = vcmask 293888
        %v225 = vsel %vm223, %v192, 0
        %vm227 = vcmask 1041408
        %v229 = vsel %vm227, %v217, 0
        %v232 = vsel %vm227, %v218, 0
        %234 = vmatprep.subr.bf16.mxu0 0
        %235 = vmatpush1.bf16.msra.mxu0 0
        %236 = vmatprep.subr.bf16.mxu0 0
        %237 = vmatpush1.bf16.msra.mxu0 0
        %238 = vmatprep.subr.bf16.mxu0 0
        %239 = vmatpush1.bf16.msra.mxu0 0
        %240 = vmatprep.subr.bf16.mxu0 0
        %241 = vmatpush1.bf16.msra.mxu0 0
        %242 = vmatprep.subr.bf16.mxu0 0
        %243 = vmatpush1.bf16.msra.mxu0 0
        %244 = vmatprep.subr.bf16.mxu0 %v232
        %245 = vmatpush1.bf16.msra.mxu0 %v229
        %246 = vmatprep.subr.bf16.mxu0 %v216
        %247 = vmatpush1.bf16.msra.mxu0 %v215
        %248 = vmatprep.subr.bf16.mxu0 %v214
        %249 = vmatpush1.bf16.msra.mxu0 %v213
        %250 = vmatprep.subr.bf16.mxu0 0
        %251 = vmatpush2.bf16.msra.mxu0 0
        %252 = vmatprep.subr.bf16.mxu0 0
        %253 = vmatpush2.bf16.msra.mxu0 0
        %254 = vmatprep.subr.bf16.mxu0 0
        %255 = vmatpush2.bf16.msra.mxu0 0
        %256 = vmatprep.subr.bf16.mxu0 0
        %257 = vmatpush2.bf16.msra.mxu0 0
        %258 = vmatprep.subr.bf16.mxu0 0
        %259 = vmatpush2.bf16.msra.mxu0 0
        %260 = vmatprep.subr.bf16.mxu0 0
        %261 = vmatpush2.bf16.msra.mxu0 0
        %262 = vmatprep.subr.bf16.mxu0 0
        %263 = vmatpush2.bf16.msra.mxu0 0
        %264 = vmatprep.subr.bf16.mxu0 0
        %265 = vmatpush2.bf16.msra.mxu0 0
        %266 = vmatprep.mubr.bf16.mxu0 0
        %267 = vmatmul.mubr.bf16.gmra.mxu0 %v225
        %v268 = vpop.f32.mrf.mxu0
        %v269 = vadd.f32 0.0, %v268
        %v270 = vpop.f32.mrf.mxu0
        %v271 = vadd.f32 0.0, %v270
        %v272 = vpop.f32.mrf.mxu0
        %v273 = vpop.f32.mrf.mxu0
        %274 = vdwg.mxu0
        %s275 = smul.u32 %s16, 2
        %s276 = smul.addr %s275, 8
        %s277 = scalar_lea.vmem [#allocation4], %s276
        %278 = vst [vmem:[%s277] sm:$0xff] %v269
        %279 = vst [vmem:[%s277 + $0x8] sm:$0xff] %v271
        %v280 = vld [vmem:[#allocation2] sm:$0xff]
        %v281 = vadd.f32 %v269, %v271
        %282 = vadd.xlane.f32.xlu0 %v281
        %v283 = vpop.xlane.xlu0 %282
        %v284 = vadd.f32 %v280, %v283
        %vm285 = vcmask 7168
        %286 = vst.msk [vmem:[#allocation2] sm:$0xff] %vm285, %v284
        %v287 = vld [vmem:[#allocation3] sm:$0xff]
        %v288 = vmul.f32 %v269, %v269
        %v289 = vmul.f32 %v271, %v271
        %v290 = vadd.f32 %v288, %v289
        %291 = vadd.xlane.f32.xlu0 %v290
        %v292 = vpop.xlane.xlu0 %291
        %v293 = vadd.f32 %v287, %v292
        %294 = vst.msk [vmem:[#allocation3] sm:$0xff] %vm285, %v293
        %p295 = scmp.eq.s32.totalorder %s16, 1
        // Predicated region
        $region41: #{tpu_custom_call.1} parent=35 // pred_check
          %p296 = pneg %p295
        $region42: #{tpu_custom_call.1} parent=35 // pred_check_branch
          %298 = sbr.rel (%p296) target = $region44
        $region43: #{tpu_custom_call.1} parent=35 // pred_region
          %v299 = vld [vmem:[#allocation2] sm:$0xff]
          %v300 = vmul.f32 %v299, 0.001953125
          %v301 = vld [vmem:[#allocation3] sm:$0xff]
          %v302 = vmul.f32 %v301, 0.001953125
          %v303 = vmul.f32 %v300, %v300
          %v304 = vsub.f32 %v302, %v303
          %v305 = vmax.f32 %v304, 0.0
          %v306 = vld [vmem:[%s2] sm:$0xff]
          %v307 = vadd.f32 %v305, 1e-05
          %v308 = vrsqrt.pop %v307
          %v309 = vmul.f32 %v306, %v308
          %v310 = vld [vmem:[%s3] sm:$0xff]
          %v311 = vmul.f32 %v300, %v309
          %v312 = vsub.f32 %v310, %v311
          %v313 = vld [vmem:[#allocation4] sm:$0xff]
          %v314 = vld [vmem:[#allocation4 + $0x8] sm:$0xff]
          %v315 = vld [vmem:[#allocation4 + $0x10] sm:$0xff]
          %v316 = vld [vmem:[#allocation4 + $0x18] sm:$0xff]
          %318 = vset.pattern.permute.xlu0 0
          %319 = vperm.xlu0 %318, %v309
          %v320 = vpop.permute.xlu0 %319
          %v322 = vmul.f32 %v313, %v320
          %v323 = vmul.f32 %v314, %v320
          %v324 = vmul.f32 %v315, %v320
          %v325 = vmul.f32 %v316, %v320
          %327 = vset.pattern.permute.xlu0 0
          %328 = vperm.xlu0 %327, %v312
          %v329 = vpop.permute.xlu0 %328
          %v331 = vadd.f32 %v322, %v329
          %v332 = vadd.f32 %v323, %v329
          %v333 = vadd.f32 %v324, %v329
          %v334 = vadd.f32 %v325, %v329
          %vm335 = vcmp.ge.f32.partialorder %v331, 0.0
          %vm336 = vcmp.ge.f32.partialorder %v332, 0.0
          %vm337 = vcmp.ge.f32.partialorder %v333, 0.0
          %vm338 = vcmp.ge.f32.partialorder %v334, 0.0
          %v339 = vmul.f32 %v331, 0.2
          %v340 = vmul.f32 %v332, 0.2
          %v341 = vmul.f32 %v333, 0.2
          %v342 = vmul.f32 %v334, 0.2
          %v343 = vsel %vm335, %v331, %v339
          %v344 = vsel %vm336, %v332, %v340
          %v345 = vsel %vm337, %v333, %v341
          %v346 = vsel %vm338, %v334, %v342
          %347 = vst [vmem:[#allocation4] sm:$0xff] %v343
          %348 = vst [vmem:[#allocation4 + $0x8] sm:$0xff] %v344
          %349 = vst [vmem:[#allocation4 + $0x10] sm:$0xff] %v345
          %350 = vst [vmem:[#allocation4 + $0x18] sm:$0xff] %v346
        $region44: #{tpu_custom_call.1} parent=35 // pred_fallthru
          _
        // Predicated region
        $region45: #{tpu_custom_call.1} parent=35 // pred_check
          %p351 = pneg %p118
        $region46: #{tpu_custom_call.1} parent=35 // pred_check_branch
          %353 = sbr.rel (%p351) target = $region48
        $region47: #{tpu_custom_call.1} parent=35 // pred_region
          %s355 = ssub.s32 512, 512
          %356 = vsyncadd [#allocation5], %s355
          %s357 = sshll.u32 [#allocation4], 4
          %s358 = int_to_ptr.vmem [resolvable:$true] %s357
          %363 = dma.vmem_to_hbm [thread:$0]  %s358, 512, %s4, [#allocation5], 256, 256, 16
        $region48: #{tpu_custom_call.1} parent=35 // pred_fallthru
          _
        // Predicated region
        $region49: #{tpu_custom_call.1} parent=35 // pred_check
          %p364 = pneg %p118
        $region50: #{tpu_custom_call.1} parent=35 // pred_check_branch
          %366 = sbr.rel (%p364) target = $region52
        $region51: #{tpu_custom_call.1} parent=35 // pred_region
          %367 = dma.done [#allocation5], 512
        $region52: #{tpu_custom_call.1} parent=35 // pred_fallthru
          _
      $region36: #{tpu_custom_call.1} parent=5 // pred_fallthru
        _
      %p368 = scmp.le.s32.totalorder 2, %s11
      // Predicated region
      $region53: #{tpu_custom_call.1} parent=5 // pred_check
        %p369 = pneg %p368
      $region54: #{tpu_custom_call.1} parent=5 // pred_check_branch
        %371 = sbr.rel (%p369) target = $region56
      $region55: #{tpu_custom_call.1} parent=5 // pred_region
        %s372 = ssub.s32 %s11, 2
      $region56: #{tpu_custom_call.1} parent=5 // pred_fallthru
        _
    $region6: #{tpu_custom_call.1} parent=1 // loop_footer
      %s15 = sadd.s32 1, %s11
    $region7: #{tpu_custom_call.1} parent=1 // loop_footer_branch
      %10 = sbr.rel target = $region3
    $region8: #{tpu_custom_call.1} parent=1 // loop_exit
      _
    %373 = vsyncpa [#allocation5], 1
    %s374 = scalar_lea.sflag [#allocation5], 1
    %375 = vsyncpa %s374, 1

</llo_original>
